<compile_context>
chip_gen: v6e
topology: v6e:2x2x1
jax: 0.10.0
libtpu: 0.0.40
codegen_flags: <defaults>
</compile_context>

<pallas_src>
import functools
import math

import jax
import jax.numpy as jnp
from jax.experimental import pallas as pl
from jax.experimental.pallas import tpu as pltpu


# ----------------------------------------------------------------------------
# Buffer construction (glue, plain JAX) — mirrors PositionalEncoding.__init__,
# which provides `sequence_pos_encoder.pos_encoding` of shape (max_len, 1, D).
# ----------------------------------------------------------------------------
def make_pos_encoding(max_len: int, dim_model: int) -> jnp.ndarray:
    positions = jnp.arange(0, max_len, dtype=jnp.float32).reshape(-1, 1)       # (L, 1)
    division_term = jnp.exp(
        jnp.arange(0, dim_model, 2, dtype=jnp.float32) * (-math.log(10000.0) / dim_model)
    )                                                                           # (D/2,)
    angles = positions * division_term                                          # (L, D/2)
    sin = jnp.sin(angles)
    cos = jnp.cos(angles)
    pe = jnp.stack([sin, cos], axis=-1).reshape(max_len, dim_model)             # (L, D)
    return pe[:, None, :]                                                       # (L, 1, D)


# ----------------------------------------------------------------------------
# Kernel: Linear -> SiLU -> Linear on a pre-gathered (tB, D) batch tile.
#   x_ref  : VMEM (tB, D) bf16   — gathered pos-encoding rows for this tile
#   w1/w2  : VMEM (D, D)  bf16   — pre-transposed Linear weights, grid-invariant
#   b1/b2  : VMEM (1, D)  f32    — biases, grid-invariant
#   o_ref  : VMEM (tB, D) f32    — lane-dense output tile
# ----------------------------------------------------------------------------
def _timestep_embed_kernel(x_ref, w1_ref, b1_ref, w2_ref, b2_ref, o_ref):
    # First Linear: bf16 x bf16 on the MXU, f32 accumulate; bias add in f32.
    h = jnp.dot(x_ref[...], w1_ref[...], preferred_element_type=jnp.float32)
    h = h + b1_ref[...]

    # SiLU(h) = h * sigmoid(h); exp + approx reciprocal both ride the EUP slot.
    h = h * pl.reciprocal(1.0 + jnp.exp(-h), approx=True)

    # Second Linear: cast activations back to bf16 for the MXU.
    y = jnp.dot(h.astype(jnp.bfloat16), w2_ref[...], preferred_element_type=jnp.float32)
    y = y + b2_ref[...]

    o_ref[...] = y.astype(o_ref.dtype)


# ----------------------------------------------------------------------------
# Wrapper
# ----------------------------------------------------------------------------
def timestep_embedder_forward(
    timesteps: jnp.ndarray,       # (B,) int — diffusion timestep per batch element
    pos_encoding: jnp.ndarray,    # (max_len, 1, D) f32 — buffer from PositionalEncoding
    w1: jnp.ndarray,              # (D, D) f32 — torch Linear weight (out, in)
    b1: jnp.ndarray,              # (D,)   f32
    w2: jnp.ndarray,              # (D, D) f32
    b2: jnp.ndarray,              # (D,)   f32
    *,
    max_block_b: int = 512,
) -> jnp.ndarray:                 # (B, 1, D)
    timesteps = timesteps.astype(jnp.int32)
    (B,) = timesteps.shape
    max_len, one, D = pos_encoding.shape
    assert one == 1 and w1.shape == (D, D) and w2.shape == (D, D)

    def _round_up(a, m):
        return (a + m - 1) // m * m

    # Batch tile: multiple of 8 (sublane).  Cover the whole padded batch in one grid
    # step whenever it fits under the cap — there is nothing heavy to pipeline across
    # steps since the weights are grid-invariant — and only tile for very large B.
    tB = min(max_block_b, _round_up(B, 8))
    Bp = _round_up(B, tB)
    nb = Bp // tB

    # --- gather + dtype prep in the wrapper (tiny XLA ops, not per-step kernel work) --
    pe2d = jnp.asarray(pos_encoding, jnp.float32)[:, 0, :]        # (max_len, D)
    x = pe2d[timesteps]                                            # (B, D) gather
    x = jnp.pad(x, ((0, Bp - B), (0, 0))).astype(jnp.bfloat16)     # padded rows sliced off
    # torch nn.Linear computes x @ W.T + b — transpose once here, bf16 for the MXU.
    w1_t = jnp.asarray(w1, jnp.float32).T.astype(jnp.bfloat16)     # (D_in, D_out)
    w2_t = jnp.asarray(w2, jnp.float32).T.astype(jnp.bfloat16)
    b1_r = jnp.asarray(b1, jnp.float32).reshape(1, D)
    b2_r = jnp.asarray(b2, jnp.float32).reshape(1, D)

    # Megacore split only pays when compute dominates the (duplicated) weight DMA.
    use_megacore = (nb >= 2) and (B >= 512)
    dim_sem = ("parallel" if use_megacore else "arbitrary",)

    out = pl.pallas_call(
        _timestep_embed_kernel,
        out_shape=jax.ShapeDtypeStruct((Bp, D), jnp.float32),
        grid_spec=pltpu.PrefetchScalarGridSpec(
            num_scalar_prefetch=0,
            grid=(nb,),
            in_specs=[
                pl.BlockSpec((tB, D), lambda i: (i, 0)),     # x tile (double-buffered)
                # Constant index_maps -> resident in VMEM, no per-step re-DMA.
                pl.BlockSpec((D, D), lambda i: (0, 0)),      # W1^T (bf16)
                pl.BlockSpec((1, D), lambda i: (0, 0)),      # b1
                pl.BlockSpec((D, D), lambda i: (0, 0)),      # W2^T (bf16)
                pl.BlockSpec((1, D), lambda i: (0, 0)),      # b2
            ],
            out_specs=pl.BlockSpec((tB, D), lambda i: (i, 0)),   # lane-dense output
        ),
        compiler_params=pltpu.CompilerParams(dimension_semantics=dim_sem),
    )(x, w1_t, b1_r, w2_t, b2_r)

    return out[:B].reshape(B, 1, D)


# ----------------------------------------------------------------------------
# Demo / self-check
# ----------------------------------------------------------------------------
if __name__ == "__main__":
    latent_dim = 32
    max_len = 16
    batch = 2

    key = jax.random.PRNGKey(0)
    k_ts, k_w1, k_b1, k_w2, k_b2 = jax.random.split(key, 5)

    timesteps = jax.random.randint(k_ts, (batch,), 0, max_len, dtype=jnp.int32)
    pos_encoding = make_pos_encoding(max_len, latent_dim)

    # Parameters in PyTorch nn.Linear layout: weight (out, in), bias (out,).
    lim = 1.0 / math.sqrt(latent_dim)
    w1 = jax.random.uniform(k_w1, (latent_dim, latent_dim), jnp.float32, -lim, lim)
    b1 = jax.random.uniform(k_b1, (latent_dim,), jnp.float32, -lim, lim)
    w2 = jax.random.uniform(k_w2, (latent_dim, latent_dim), jnp.float32, -lim, lim)
    b2 = jax.random.uniform(k_b2, (latent_dim,), jnp.float32, -lim, lim)

    out = timestep_embedder_forward(timesteps, pos_encoding, w1, b1, w2, b2)
    out = jax.block_until_ready(out)

    # Pure-JAX f32 reference of the torch forward.
    x = pos_encoding[timesteps]                  # (B, 1, D)
    h = x @ w1.T + b1
    h = h * (1.0 / (1.0 + jnp.exp(-h)))          # SiLU
    ref = h @ w2.T + b2

    assert out.shape == (batch, 1, latent_dim)
    # Matmuls run in bf16 + approx reciprocal in the kernel -> loosened tolerance.
    assert bool(jnp.allclose(out, ref, atol=5e-2, rtol=5e-2)), "mismatch vs reference"
    print("KERNEL_OK")
</pallas_src>

<mosaic_0001>
module attributes {stable_mosaic.version = 11 : i64} {
  func.func @_timestep_embed_kernel(%arg0: i32, %arg1: memref<8x32xbf16, #tpu.memory_space<vmem>>, %arg2: memref<32x32xbf16, #tpu.memory_space<vmem>>, %arg3: memref<1x32xf32, #tpu.memory_space<vmem>>, %arg4: memref<32x32xbf16, #tpu.memory_space<vmem>>, %arg5: memref<1x32xf32, #tpu.memory_space<vmem>>, %arg6: memref<8x32xf32, #tpu.memory_space<vmem>>) attributes {dimension_semantics = [#tpu.dimension_semantics<arbitrary>], iteration_bounds = array<i64: 1>, scalar_prefetch = 0 : i64, scratch_operands = 0 : i64, tpu.core_type = #tpu.core_type<tc>, window_params = [{transform_indices = @transform_0, window_bounds = array<i64: 8, 32>}, {pipeline_mode = #tpu.pipeline_mode<synchronous>, transform_indices = @transform_1, window_bounds = array<i64: 32, 32>}, {pipeline_mode = #tpu.pipeline_mode<synchronous>, transform_indices = @transform_2, window_bounds = array<i64: 1, 32>}, {pipeline_mode = #tpu.pipeline_mode<synchronous>, transform_indices = @transform_3, window_bounds = array<i64: 32, 32>}, {pipeline_mode = #tpu.pipeline_mode<synchronous>, transform_indices = @transform_4, window_bounds = array<i64: 1, 32>}, {transform_indices = @transform_5, window_bounds = array<i64: 8, 32>}]} {
    %c0 = arith.constant 0 : index
    %c0_0 = arith.constant 0 : index
    %0 = vector.load %arg1[%c0, %c0_0] : memref<8x32xbf16, #tpu.memory_space<vmem>>, vector<8x32xbf16>
    %c0_1 = arith.constant 0 : index
    %c0_2 = arith.constant 0 : index
    %1 = vector.load %arg2[%c0_1, %c0_2] : memref<32x32xbf16, #tpu.memory_space<vmem>>, vector<32x32xbf16>
    %cst = arith.constant dense<0.000000e+00> : vector<8x32xf32>
    %2 = tpu.matmul %0, %1, %cst {dimension_numbers = #tpu.dot_dimension_numbers<[1], [0], [0], [1], [0, 0, 1, 1], [], []>} : vector<8x32xbf16>, vector<32x32xbf16>, vector<8x32xf32> -> vector<8x32xf32>
    %c0_3 = arith.constant 0 : index
    %c0_4 = arith.constant 0 : index
    %3 = vector.load %arg3[%c0_3, %c0_4] : memref<1x32xf32, #tpu.memory_space<vmem>>, vector<1x32xf32>
    %4 = vector.broadcast %3 : vector<1x32xf32> to vector<8x32xf32>
    %5 = arith.addf %2, %4 : vector<8x32xf32>
    %cst_5 = arith.constant 0.000000e+00 : f32
    %6 = vector.broadcast %cst_5 : f32 to vector<8x32xf32>
    %7 = arith.subf %6, %5 : vector<8x32xf32>
    %8 = math.exp %7 : vector<8x32xf32>
    %cst_6 = arith.constant 1.000000e+00 : f32
    %9 = vector.broadcast %cst_6 : f32 to vector<8x32xf32>
    %10 = arith.addf %9, %8 : vector<8x32xf32>
    %11 = tpu.reciprocal %10 {approx = true} : vector<8x32xf32> -> vector<8x32xf32>
    %12 = arith.mulf %5, %11 : vector<8x32xf32>
    %13 = arith.truncf %12 : vector<8x32xf32> to vector<8x32xbf16>
    %c0_7 = arith.constant 0 : index
    %c0_8 = arith.constant 0 : index
    %14 = vector.load %arg4[%c0_7, %c0_8] : memref<32x32xbf16, #tpu.memory_space<vmem>>, vector<32x32xbf16>
    %cst_9 = arith.constant dense<0.000000e+00> : vector<8x32xf32>
    %15 = tpu.matmul %13, %14, %cst_9 {dimension_numbers = #tpu.dot_dimension_numbers<[1], [0], [0], [1], [0, 0, 1, 1], [], []>} : vector<8x32xbf16>, vector<32x32xbf16>, vector<8x32xf32> -> vector<8x32xf32>
    %c0_10 = arith.constant 0 : index
    %c0_11 = arith.constant 0 : index
    %16 = vector.load %arg5[%c0_10, %c0_11] : memref<1x32xf32, #tpu.memory_space<vmem>>, vector<1x32xf32>
    %17 = vector.broadcast %16 : vector<1x32xf32> to vector<8x32xf32>
    %18 = arith.addf %15, %17 : vector<8x32xf32>
    %c0_12 = arith.constant 0 : index
    %c0_13 = arith.constant 0 : index
    %19 = vector.load %arg6[%c0_12, %c0_13] : memref<8x32xf32, #tpu.memory_space<vmem>>, vector<8x32xf32>
    tpu.vector_store %arg6[%c0_12, %c0_13], %18 {strides = array<i32>} : memref<8x32xf32, #tpu.memory_space<vmem>>, vector<8x32xf32>,
    return
  }
  func.func @transform_0(%arg0: i32) -> (i32, i32) {
    %c0_i32 = arith.constant 0 : i32
    %c0_i32_0 = arith.constant 0 : i32
    return %arg0, %c0_i32 : i32, i32
  }
  func.func @transform_1(%arg0: i32) -> (i32, i32) {
    %c0_i32 = arith.constant 0 : i32
    %c0_i32_0 = arith.constant 0 : i32
    %c0_i32_1 = arith.constant 0 : i32
    return %c0_i32, %c0_i32_0 : i32, i32
  }
  func.func @transform_2(%arg0: i32) -> (i32, i32) {
    %c0_i32 = arith.constant 0 : i32
    %c0_i32_0 = arith.constant 0 : i32
    %c0_i32_1 = arith.constant 0 : i32
    return %c0_i32, %c0_i32_0 : i32, i32
  }
  func.func @transform_3(%arg0: i32) -> (i32, i32) {
    %c0_i32 = arith.constant 0 : i32
    %c0_i32_0 = arith.constant 0 : i32
    %c0_i32_1 = arith.constant 0 : i32
    return %c0_i32, %c0_i32_0 : i32, i32
  }
  func.func @transform_4(%arg0: i32) -> (i32, i32) {
    %c0_i32 = arith.constant 0 : i32
    %c0_i32_0 = arith.constant 0 : i32
    %c0_i32_1 = arith.constant 0 : i32
    return %c0_i32, %c0_i32_0 : i32, i32
  }
  func.func @transform_5(%arg0: i32) -> (i32, i32) {
    %c0_i32 = arith.constant 0 : i32
    %c0_i32_0 = arith.constant 0 : i32
    return %arg0, %c0_i32 : i32, i32
  }
}

</mosaic_0001>

<llo_original>
// kernel: tpu_custom_call.1
$region0: #{tpu_custom_call.1}
  #allocation0 [shape = 'u32[]', space=smem, size = 0x4, offset = 0x4, fixed_abs, tag = 'smem constant byte address 0x4 - core index']
  #allocation1 [shape = 'u32[144,128]{1,0:T(1,128)}', space=vmem, size = 0x12000, scoped, tag = 'internal scratch']
  %s0 = inlined_call_operand.hbm [shape: bf16[8,32], index: 0, kind: input, shape index: {}]
  %s1 = inlined_call_operand.hbm [shape: bf16[32,32], index: 1, kind: input, shape index: {}]
  %s2 = inlined_call_operand.vmem [shape: f32[1,32], index: 2, kind: input, shape index: {}]
  %s3 = inlined_call_operand.hbm [shape: bf16[32,32], index: 3, kind: input, shape index: {}]
  %s4 = inlined_call_operand.vmem [shape: f32[1,32], index: 4, kind: input, shape index: {}]
  %s5 = inlined_call_operand.hbm [shape: f32[8,32], index: 5, kind: output, shape index: {}]
  %s6 = sld [smem:[#allocation0]]
  $region42: #{tpu_custom_call.1} parent=0
    _
  %s8 = ssub.s32 1, %s6
  %s9 = scalar_select 0, %s8, %s6
  $region1: #{tpu_custom_call.1} parent=0
    #allocation2 [shape = 'u8[2048]{0}', space=vmem, size = 0x800, scoped, tag = 'input window, operand 0, single buffered']
    #allocation3 [shape = 's32[1]{0}', space=sflag, size = 0x4, scoped, tag = 'scoped memory for tpu_custom_call.1']
    #allocation4 [shape = 's32[1]{0}', space=sflag, size = 0x4, scoped, tag = 'scoped memory for tpu_custom_call.1']
    #allocation5 [shape = 'u8[8192]{0}', space=vmem, size = 0x2000, scoped, tag = 'input window, operand 1, single buffered']
    #allocation6 [shape = 's32[1]{0}', space=sflag, size = 0x4, scoped, tag = 'scoped memory for tpu_custom_call.1']
    #allocation7 [shape = 'u8[8192]{0}', space=vmem, size = 0x2000, scoped, tag = 'input window, operand 3, single buffered']
    #allocation8 [shape = 'u8[4096]{0}', space=vmem, size = 0x1000, scoped, tag = 'output window, operand 0, single buffered']
    %10 = vsyncpa [#allocation3], 0
    %11 = vsyncpa [#allocation6], 0
    %12 = vsyncpa [#allocation4], 0
    // Predicated region
    $region2: #{tpu_custom_call.1} parent=1 // pred_check
      _
    $region3: #{tpu_custom_call.1} parent=1 // pred_check_branch
      %14 = sbr.rel (0) target = $region5
    $region4: #{tpu_custom_call.1} parent=1 // pred_region
      %s16 = ssub.s32 64, 64
      %17 = vsyncadd [#allocation3], %s16
      %s19 = sshll.u32 [#allocation2], 4
      %s20 = int_to_ptr.vmem [resolvable:$true] %s19
      %22 = dma.hbm_to_vmem [thread:$0]  %s0, 64, %s20, [#allocation3]
    $region5: #{tpu_custom_call.1} parent=1 // pred_fallthru
      _
    // Predicated region
    $region6: #{tpu_custom_call.1} parent=1 // pred_check
      _
    $region7: #{tpu_custom_call.1} parent=1 // pred_check_branch
      %24 = sbr.rel (0) target = $region9
    $region8: #{tpu_custom_call.1} parent=1 // pred_region
      %s26 = ssub.s32 256, 256
      %27 = vsyncadd [#allocation6], %s26
      %s28 = sshll.u32 [#allocation5], 4
      %s29 = int_to_ptr.vmem [resolvable:$true] %s28
      %34 = dma.hbm_to_vmem [thread:$0]  %s1, 256, %s29, [#allocation6], 64, 64, 4
    $region9: #{tpu_custom_call.1} parent=1 // pred_fallthru
      _
    // Predicated region
    $region10: #{tpu_custom_call.1} parent=1 // pred_check
      _
    $region11: #{tpu_custom_call.1} parent=1 // pred_check_branch
      %36 = sbr.rel (0) target = $region13
    $region12: #{tpu_custom_call.1} parent=1 // pred_region
      _
    $region13: #{tpu_custom_call.1} parent=1 // pred_fallthru
      _
    // Predicated region
    $region14: #{tpu_custom_call.1} parent=1 // pred_check
      _
    $region15: #{tpu_custom_call.1} parent=1 // pred_check_branch
      %38 = sbr.rel (0) target = $region17
    $region16: #{tpu_custom_call.1} parent=1 // pred_region
      %s40 = ssub.s32 256, 256
      %41 = vsyncadd [#allocation6], %s40
      %s42 = sshll.u32 [#allocation7], 4
      %s43 = int_to_ptr.vmem [resolvable:$true] %s42
      %48 = dma.hbm_to_vmem [thread:$0]  %s3, 256, %s43, [#allocation6], 64, 64, 4
    $region17: #{tpu_custom_call.1} parent=1 // pred_fallthru
      _
    // Predicated region
    $region18: #{tpu_custom_call.1} parent=1 // pred_check
      _
    $region19: #{tpu_custom_call.1} parent=1 // pred_check_branch
      %50 = sbr.rel (0) target = $region21
    $region20: #{tpu_custom_call.1} parent=1 // pred_region
      _
    $region21: #{tpu_custom_call.1} parent=1 // pred_fallthru
      _
    // Predicated region
    $region22: #{tpu_custom_call.1} parent=1 // pred_check
      _
    $region23: #{tpu_custom_call.1} parent=1 // pred_check_branch
      %52 = sbr.rel (0) target = $region25
    $region24: #{tpu_custom_call.1} parent=1 // pred_region
      %53 = dma.done [#allocation3], 64
    $region25: #{tpu_custom_call.1} parent=1 // pred_fallthru
      _
    // Predicated region
    $region26: #{tpu_custom_call.1} parent=1 // pred_check
      _
    $region27: #{tpu_custom_call.1} parent=1 // pred_check_branch
      %55 = sbr.rel (0) target = $region29
    $region28: #{tpu_custom_call.1} parent=1 // pred_region
      %56 = dma.done [#allocation6], 256
    $region29: #{tpu_custom_call.1} parent=1 // pred_fallthru
      _
    // Predicated region
    $region30: #{tpu_custom_call.1} parent=1 // pred_check
      _
    $region31: #{tpu_custom_call.1} parent=1 // pred_check_branch
      %58 = sbr.rel (0) target = $region33
    $region32: #{tpu_custom_call.1} parent=1 // pred_region
      %59 = dma.done [#allocation6], 256
    $region33: #{tpu_custom_call.1} parent=1 // pred_fallthru
      _
    %v61 = vld [vmem:[#allocation2] sm:$0xf]
    %v62 = vld [vmem:[#allocation5] sm:$0xf]
    %v63 = vld [vmem:[#allocation5 + $0x4] sm:$0xf]
    %v64 = vld [vmem:[#allocation5 + $0x8] sm:$0xf]
    %v65 = vld [vmem:[#allocation5 + $0xc] sm:$0xf]
    %v66 = vld [vmem:[%s2] sm:$0x1]
    %v68 = vlaneseq
    %v69 = vshrl.u32 %v68, 7
    %v70 = vsub.s32 0, %v69
    %v71 = vrot.slane %v66, %v70
    %v77 = vunpack.c.l.b16 %v62
    %v78 = vunpack.c.l.b16 %v63
    %v79 = vunpack.c.l.b16 %v64
    %v80 = vunpack.c.l.b16 %v65
    %v81 = vpack.c.b16 %v78, %v77
    %v82 = vpack.c.b16 %v80, %v79
    %vm85 = vcmask 261120
    %v87 = vsel %vm85, %v61, 0
    %89 = vmatprep.subr.bf16.mxu0 0
    %90 = vmatpush1.bf16.msra.mxu0 0
    %91 = vmatprep.subr.bf16.mxu0 0
    %92 = vmatpush1.bf16.msra.mxu0 0
    %93 = vmatprep.subr.bf16.mxu0 0
    %94 = vmatpush1.bf16.msra.mxu0 0
    %95 = vmatprep.subr.bf16.mxu0 0
    %96 = vmatpush1.bf16.msra.mxu0 0
    %97 = vmatprep.subr.bf16.mxu0 0
    %98 = vmatpush1.bf16.msra.mxu0 0
    %99 = vmatprep.subr.bf16.mxu0 0
    %100 = vmatpush1.bf16.msra.mxu0 0
    %101 = vmatprep.subr.bf16.mxu0 0
    %102 = vmatpush1.bf16.msra.mxu0 %v82
    %103 = vmatprep.subr.bf16.mxu0 0
    %104 = vmatpush1.bf16.msra.mxu0 %v81
    %105 = vmatprep.subr.bf16.mxu0 0
    %106 = vmatpush2.bf16.msra.mxu0 0
    %107 = vmatprep.subr.bf16.mxu0 0
    %108 = vmatpush2.bf16.msra.mxu0 0
    %109 = vmatprep.subr.bf16.mxu0 0
    %110 = vmatpush2.bf16.msra.mxu0 0
    %111 = vmatprep.subr.bf16.mxu0 0
    %112 = vmatpush2.bf16.msra.mxu0 0
    %113 = vmatprep.subr.bf16.mxu0 0
    %114 = vmatpush2.bf16.msra.mxu0 0
    %115 = vmatprep.subr.bf16.mxu0 0
    %116 = vmatpush2.bf16.msra.mxu0 0
    %117 = vmatprep.subr.bf16.mxu0 0
    %118 = vmatpush2.bf16.msra.mxu0 0
    %119 = vmatprep.subr.bf16.mxu0 0
    %120 = vmatpush2.bf16.msra.mxu0 0
    %121 = vmatprep.mubr.bf16.mxu0 0
    %122 = vmatmul.mubr.bf16.gmra.mxu0 %v87
    %v123 = vpop.f32.mrf.mxu0
    %v124 = vadd.f32 %v71, %v123
    %v125 = vpop.f32.mrf.mxu0
    %v126 = vpop.f32.mrf.mxu0
    %v127 = vpop.f32.mrf.mxu0
    %128 = vdwg.mxu0
    %v129 = vsub.f32 0.0, %v124
    %v130 = vmul.f32 %v129, 1.442695
    %v131 = vpow.pop %v130
    %v132 = vadd.f32 %v131, 1.0
    %v133 = vrcp.pop %v132
    %v134 = vmul.f32 %v124, %v133
    %v135 = vpack.c.bf16 %v134, %v134
    %v136 = vld [vmem:[#allocation7] sm:$0xf]
    %v137 = vld [vmem:[#allocation7 + $0x4] sm:$0xf]
    %v138 = vld [vmem:[#allocation7 + $0x8] sm:$0xf]
    %v139 = vld [vmem:[#allocation7 + $0xc] sm:$0xf]
    %v140 = vld [vmem:[%s4] sm:$0x1]
    %v142 = vlaneseq
    %v143 = vshrl.u32 %v142, 7
    %v144 = vsub.s32 0, %v143
    %v145 = vrot.slane %v140, %v144
    %v151 = vunpack.c.l.b16 %v136
    %v152 = vunpack.c.l.b16 %v137
    %v153 = vunpack.c.l.b16 %v138
    %v154 = vunpack.c.l.b16 %v139
    %v155 = vpack.c.b16 %v152, %v151
    %v156 = vpack.c.b16 %v154, %v153
    %v160 = vsel %vm85, %v135, 0
    %162 = vmatprep.subr.bf16.mxu0 0
    %163 = vmatpush1.bf16.msra.mxu0 0
    %164 = vmatprep.subr.bf16.mxu0 0
    %165 = vmatpush1.bf16.msra.mxu0 0
    %166 = vmatprep.subr.bf16.mxu0 0
    %167 = vmatpush1.bf16.msra.mxu0 0
    %168 = vmatprep.subr.bf16.mxu0 0
    %169 = vmatpush1.bf16.msra.mxu0 0
    %170 = vmatprep.subr.bf16.mxu0 0
    %171 = vmatpush1.bf16.msra.mxu0 0
    %172 = vmatprep.subr.bf16.mxu0 0
    %173 = vmatpush1.bf16.msra.mxu0 0
    %174 = vmatprep.subr.bf16.mxu0 0
    %175 = vmatpush1.bf16.msra.mxu0 %v156
    %176 = vmatprep.subr.bf16.mxu0 0
    %177 = vmatpush1.bf16.msra.mxu0 %v155
    %178 = vmatprep.subr.bf16.mxu0 0
    %179 = vmatpush2.bf16.msra.mxu0 0
    %180 = vmatprep.subr.bf16.mxu0 0
    %181 = vmatpush2.bf16.msra.mxu0 0
    %182 = vmatprep.subr.bf16.mxu0 0
    %183 = vmatpush2.bf16.msra.mxu0 0
    %184 = vmatprep.subr.bf16.mxu0 0
    %185 = vmatpush2.bf16.msra.mxu0 0
    %186 = vmatprep.subr.bf16.mxu0 0
    %187 = vmatpush2.bf16.msra.mxu0 0
    %188 = vmatprep.subr.bf16.mxu0 0
    %189 = vmatpush2.bf16.msra.mxu0 0
    %190 = vmatprep.subr.bf16.mxu0 0
    %191 = vmatpush2.bf16.msra.mxu0 0
    %192 = vmatprep.subr.bf16.mxu0 0
    %193 = vmatpush2.bf16.msra.mxu0 0
    %194 = vmatprep.mubr.bf16.mxu0 0
    %195 = vmatmul.mubr.bf16.gmra.mxu0 %v160
    %v196 = vpop.f32.mrf.mxu0
    %v197 = vadd.f32 %v145, %v196
    %v198 = vpop.f32.mrf.mxu0
    %v199 = vpop.f32.mrf.mxu0
    %v200 = vpop.f32.mrf.mxu0
    %201 = vdwg.mxu0
    %202 = vst.msk [vmem:[#allocation8] sm:$0xff] %vm85, %v197
    // Predicated region
    $region34: #{tpu_custom_call.1} parent=1 // pred_check
      _
    $region35: #{tpu_custom_call.1} parent=1 // pred_check_branch
      %204 = sbr.rel (0) target = $region37
    $region36: #{tpu_custom_call.1} parent=1 // pred_region
      %s206 = ssub.s32 128, 128
      %207 = vsyncadd [#allocation4], %s206
      %s209 = sshll.u32 [#allocation8], 4
      %s210 = int_to_ptr.vmem [resolvable:$true] %s209
      %212 = dma.vmem_to_hbm [thread:$0]  %s210, 128, %s5, [#allocation4]
    $region37: #{tpu_custom_call.1} parent=1 // pred_fallthru
      _
    // Predicated region
    $region38: #{tpu_custom_call.1} parent=1 // pred_check
      _
    $region39: #{tpu_custom_call.1} parent=1 // pred_check_branch
      %214 = sbr.rel (0) target = $region41
    $region40: #{tpu_custom_call.1} parent=1 // pred_region
      %215 = dma.done [#allocation4], 128
    $region41: #{tpu_custom_call.1} parent=1 // pred_fallthru
      _
    %216 = vsyncpa [#allocation3], 1
    %217 = vsyncpa [#allocation6], 1
    %218 = vsyncpa [#allocation4], 1

</llo_original>
